<compile_context>
chip_gen: v5e
topology: v5e:2x2
jax: 0.10.0
libtpu: 0.0.40
codegen_flags: <defaults>
</compile_context>

<pallas_src>
import functools

import jax
import jax.numpy as jnp
from jax import lax
from jax.experimental import pallas as pl
from jax.experimental.pallas import tpu as pltpu


def _round_up(x, m):
    return ((x + m - 1) // m) * m


def _cdiv(a, b):
    return (a + b - 1) // b


def _poly_loss_kernel(x_ref, y_ref, expand_ref, w_ref, out_ref, *,
                      epsilon, n_valid, tiles_per):
    # x_ref:      (TR, 128) logits, lane-interleaved: lane 2k -> class0, 2k+1 -> class1
    # y_ref:      (TR, 64)  integer labels (one per sample column)
    # expand_ref: (64, 128) constant 0/1 matrix, expand[k, l] = (l // 2 == k)
    # w_ref:      (1, 128)  per-lane class weight (w0, w1, w0, w1, ...)
    # out_ref:    (1, 128)  per-lane partial sums for this parallel slice
    p = pl.program_id(0)
    t = pl.program_id(1)
    g = p * tiles_per + t            # logical row-tile index (un-clamped; any
                                     # overhang tile is fully masked below)

    @pl.when(t == 0)
    def _init():
        out_ref[...] = jnp.zeros_like(out_ref)

    x = x_ref[...].astype(jnp.float32)                       # (TR, 128)
    tr = x.shape[0]

    row = lax.broadcasted_iota(jnp.int32, (tr, 128), 0)
    lane = lax.broadcasted_iota(jnp.int32, (tr, 128), 1)
    elem = (g * tr + row) * 128 + lane                        # flat index into (2*B,)
    valid = elem < n_valid
    x = jnp.where(valid, x, 0.0)                              # keep inf/nan out of exp/log

    is_odd = (lane % 2) == 1                                  # odd lanes hold class-1 logits
    # The other logit of the same sample sits in the adjacent lane:
    #   even lane pairs with lane+1 (roll by 127 == -1), odd lane with lane-1.
    partner = jnp.where(is_odd,
                        pltpu.roll(x, shift=1, axis=1),
                        pltpu.roll(x, shift=127, axis=1))
    d = x - partner                                           # this-class minus other-class
    q = jnp.exp(-jnp.abs(d))
    nll = jnp.maximum(-d, 0.0) + jnp.log(1.0 + q)             # -log softmax[this class]
    pt = jnp.where(d >= 0.0, 1.0, q) / (1.0 + q)              # softmax[this class] (reuses q)

    # Expand labels (TR, 64) -> per-lane (TR, 128): y_lane[r, l] = labels[r, l//2].
    y = y_ref[...].astype(jnp.float32)                        # (TR, 64)
    y_lane = jnp.dot(y, expand_ref[...], preferred_element_type=jnp.float32)
    one_hot = jnp.where(is_odd, y_lane, 1.0 - y_lane)         # 1 on the true-class lane

    w_lane = w_ref[...].astype(jnp.float32)                   # (1, 128)
    poly1 = one_hot * (w_lane * nll + epsilon * (1.0 - pt))
    poly1 = jnp.where(valid, poly1, 0.0)

    out_ref[...] += jnp.sum(poly1, axis=0, keepdims=True)     # (1, 128)


def poly_loss(predicted, labels, class_weight, epsilon=1.0, tile_rows=8192):
    """predicted: (B, 2) logits, labels: (B,) int, class_weight: (2,) -> scalar f32."""
    B, C = predicted.shape
    if C != 2:
        raise ValueError("PolyLoss module is binary (C must be 2).")

    # --- layout: free row-major reshapes only (no transpose / relayout) --------
    spr = 128 // C                                    # samples per 128-lane row (64)
    b_pad = max(_round_up(B, spr), spr * 8)           # >= 8 rows; pad only if needed
    if b_pad != B:
        predicted = jnp.pad(predicted, ((0, b_pad - B), (0, 0)))
        labels = jnp.pad(labels, (0, b_pad - B))
    rows = b_pad // spr
    x2d = predicted.reshape(rows, 128)                # free (row-major) reshape
    y2d = labels.reshape(rows, spr)                   # keep producer's int dtype

    # Small resident constants.
    expand = (jnp.arange(128)[None, :] // 2 == jnp.arange(spr)[:, None]
              ).astype(jnp.float32)                                  # (64, 128)
    w_lane = jnp.tile(class_weight.astype(jnp.float32), spr).reshape(1, 128)

    # --- tiling -----------------------------------------------------------------
    if rows <= tile_rows:
        tr = rows                                     # single block == full dims
    else:
        tr = max(8, (int(tile_rows) // 8) * 8)        # sublane-aligned tile
    tiles_total = _cdiv(rows, tr)
    n_parts = 2 if tiles_total >= 2 else 1            # >= 2 partials -> both v7x TCs
    tiles_per = _cdiv(tiles_total, n_parts)

    def data_map(p, t):
        # Clamp the (rare) overhang tile; its contribution is masked in-kernel.
        return (jnp.minimum(p * tiles_per + t, tiles_total - 1), 0)

    kernel = functools.partial(
        _poly_loss_kernel,
        epsilon=float(epsilon), n_valid=2 * B, tiles_per=tiles_per)

    partials = pl.pallas_call(
        kernel,
        out_shape=jax.ShapeDtypeStruct((1, n_parts * 128), jnp.float32),
        grid_spec=pltpu.PrefetchScalarGridSpec(
            num_scalar_prefetch=0,
            grid=(n_parts, tiles_per),
            in_specs=[
                pl.BlockSpec((tr, 128), data_map),              # logits tile
                pl.BlockSpec((tr, spr), data_map),              # labels tile
                pl.BlockSpec((spr, 128), lambda p, t: (0, 0)),  # label-expansion (resident)
                pl.BlockSpec((1, 128), lambda p, t: (0, 0)),    # per-lane class weights
            ],
            out_specs=pl.BlockSpec((1, 128), lambda p, t: (0, p)),
        ),
        compiler_params=pltpu.CompilerParams(
            dimension_semantics=("parallel", "arbitrary"),
            vmem_limit_bytes=48 * 1024 * 1024,
        ),
    )(x2d, y2d, expand, w_lane)

    # torch.mean over the true batch (CE uses reduction='none', so divide by B).
    return jnp.sum(partials) / B


def _reference(predicted, labels, class_weight, epsilon=1.0):
    # Pure-JAX reference of the PyTorch forward.
    B, C = predicted.shape
    one_hot = jax.nn.one_hot(labels, C, dtype=jnp.float32)
    logits = predicted.astype(jnp.float32)
    pt = jnp.sum(one_hot * jax.nn.softmax(logits, axis=1), axis=-1)
    log_sm = jax.nn.log_softmax(logits, axis=1)
    ce = -class_weight[labels] * jnp.sum(one_hot * log_sm, axis=-1)
    return jnp.mean(ce + epsilon * (1.0 - pt))


if __name__ == "__main__":
    key = jax.random.PRNGKey(0)
    k1, k2, k3, k4, k5, k6 = jax.random.split(key, 6)

    weight_loss = jnp.array([0.7, 1.3], dtype=jnp.float32)
    epsilon = 1.0

    # Module defaults: batch=16, binary classification.
    B1 = 16
    p1 = jax.random.normal(k1, (B1, 2), dtype=jnp.float32)
    l1 = jax.random.randint(k2, (B1,), 0, 2, dtype=jnp.int32)
    out1 = jax.block_until_ready(poly_loss(p1, l1, weight_loss, epsilon))
    ref1 = _reference(p1, l1, weight_loss, epsilon)
    assert jnp.allclose(out1, ref1, rtol=1e-4, atol=1e-5), (out1, ref1)

    # Exact-fit path: B multiple of 64, no wrapper padding, single tile.
    B2 = 512
    p2 = jax.random.normal(k3, (B2, 2), dtype=jnp.float32)
    l2 = jax.random.randint(k4, (B2,), 0, 2, dtype=jnp.int32)
    out2 = jax.block_until_ready(poly_loss(p2, l2, weight_loss, epsilon))
    ref2 = _reference(p2, l2, weight_loss, epsilon)
    assert jnp.allclose(out2, ref2, rtol=1e-4, atol=1e-5), (out2, ref2)

    # Multi-tile path: ragged last tile, clamped overhang tile, dual partial
    # accumulators, and B not a multiple of 64 (exercises pad + iota masking).
    B3 = 1200
    p3 = jax.random.normal(k5, (B3, 2), dtype=jnp.float32)
    l3 = jax.random.randint(k6, (B3,), 0, 2, dtype=jnp.int32)
    out3 = jax.block_until_ready(poly_loss(p3, l3, weight_loss, epsilon, tile_rows=8))
    ref3 = _reference(p3, l3, weight_loss, epsilon)
    assert jnp.allclose(out3, ref3, rtol=1e-4, atol=1e-5), (out3, ref3)

    print("KERNEL_OK")
</pallas_src>

<mosaic_0001>
module attributes {stable_mosaic.version = 11 : i64} {
  func.func @_poly_loss_kernel(%arg0: i32, %arg1: i32, %arg2: memref<8x128xf32, #tpu.memory_space<vmem>>, %arg3: memref<8x64xi32, #tpu.memory_space<vmem>>, %arg4: memref<64x128xf32, #tpu.memory_space<vmem>>, %arg5: memref<1x128xf32, #tpu.memory_space<vmem>>, %arg6: memref<1x128xf32, #tpu.memory_space<vmem>>) attributes {dimension_semantics = [#tpu.dimension_semantics<parallel>, #tpu.dimension_semantics<arbitrary>], iteration_bounds = array<i64: 1, 1>, scalar_prefetch = 0 : i64, scratch_operands = 0 : i64, tpu.core_type = #tpu.core_type<tc>, window_params = [{transform_indices = @transform_0, window_bounds = array<i64: 8, 128>}, {transform_indices = @transform_1, window_bounds = array<i64: 8, 64>}, {pipeline_mode = #tpu.pipeline_mode<synchronous>, transform_indices = @transform_2, window_bounds = array<i64: 64, 128>}, {pipeline_mode = #tpu.pipeline_mode<synchronous>, transform_indices = @transform_3, window_bounds = array<i64: 1, 128>}, {transform_indices = @transform_4, window_bounds = array<i64: 1, 128>}]} {
    %c1_i32 = arith.constant 1 : i32
    %0 = arith.muli %arg0, %c1_i32 : i32
    %1 = arith.addi %0, %arg1 : i32
    %c0_i32 = arith.constant 0 : i32
    %2 = arith.cmpi eq, %arg1, %c0_i32 : i32
    %3 = arith.extui %2 : i1 to i32
    %c0_i32_0 = arith.constant 0 : i32
    %4 = arith.cmpi ne, %3, %c0_i32_0 : i32
    scf.if %4 {
      %cst_32 = arith.constant 0.000000e+00 : f32
      %82 = vector.broadcast %cst_32 : f32 to vector<1x128xf32>
      %c0_33 = arith.constant 0 : index
      %c0_34 = arith.constant 0 : index
      %83 = vector.load %arg6[%c0_33, %c0_34] : memref<1x128xf32, #tpu.memory_space<vmem>>, vector<1x128xf32>
      tpu.vector_store %arg6[%c0_33, %c0_34], %82 {strides = array<i32>} : memref<1x128xf32, #tpu.memory_space<vmem>>, vector<1x128xf32>,
    } else {
    }
    %c0 = arith.constant 0 : index
    %c0_1 = arith.constant 0 : index
    %5 = vector.load %arg2[%c0, %c0_1] : memref<8x128xf32, #tpu.memory_space<vmem>>, vector<8x128xf32>
    %6 = tpu.iota {dimensions = array<i32: 0>} : vector<8x128xi32>
    %7 = tpu.iota {dimensions = array<i32: 1>} : vector<8x128xi32>
    %c8_i32 = arith.constant 8 : i32
    %8 = arith.muli %1, %c8_i32 : i32
    %9 = vector.broadcast %8 : i32 to vector<8x128xi32>
    %10 = arith.addi %9, %6 : vector<8x128xi32>
    %c128_i32 = arith.constant 128 : i32
    %11 = vector.broadcast %c128_i32 : i32 to vector<8x128xi32>
    %12 = arith.muli %10, %11 : vector<8x128xi32>
    %13 = arith.addi %12, %7 : vector<8x128xi32>
    %c32_i32 = arith.constant 32 : i32
    %14 = vector.broadcast %c32_i32 : i32 to vector<8x128xi32>
    %15 = arith.cmpi slt, %13, %14 : vector<8x128xi32>
    %cst = arith.constant 0.000000e+00 : f32
    %16 = vector.broadcast %cst : f32 to vector<8x128xf32>
    %17 = arith.select %15, %5, %16 : vector<8x128xi1>, vector<8x128xf32>
    %c2_i32 = arith.constant 2 : i32
    %c0_i32_2 = arith.constant 0 : i32
    %18 = arith.cmpi eq, %c2_i32, %c0_i32_2 : i32
    %c1_i32_3 = arith.constant 1 : i32
    %19 = arith.select %18, %c1_i32_3, %c2_i32 : i32
    %20 = vector.broadcast %19 : i32 to vector<8x128xi32>
    %21 = arith.remsi %7, %20 : vector<8x128xi32>
    %c0_i32_4 = arith.constant 0 : i32
    %22 = vector.broadcast %c0_i32_4 : i32 to vector<8x128xi32>
    %23 = arith.cmpi ne, %21, %22 : vector<8x128xi32>
    %c0_i32_5 = arith.constant 0 : i32
    %24 = vector.broadcast %c0_i32_5 : i32 to vector<8x128xi32>
    %25 = arith.cmpi slt, %21, %24 : vector<8x128xi32>
    %c0_i32_6 = arith.constant 0 : i32
    %26 = arith.cmpi slt, %19, %c0_i32_6 : i32
    %27 = vector.broadcast %26 : i1 to vector<8x128xi1>
    %28 = vector.broadcast %27 : vector<8x128xi1> to vector<8x128xi1>
    %29 = arith.xori %25, %28 : vector<8x128xi1>
    %30 = arith.andi %29, %23 : vector<8x128xi1>
    %31 = vector.broadcast %19 : i32 to vector<8x128xi32>
    %32 = arith.addi %21, %31 : vector<8x128xi32>
    %33 = arith.select %30, %32, %21 : vector<8x128xi1>, vector<8x128xi32>
    %c1_i32_7 = arith.constant 1 : i32
    %34 = vector.broadcast %c1_i32_7 : i32 to vector<8x128xi32>
    %35 = arith.cmpi eq, %33, %34 : vector<8x128xi32>
    %c1_i32_8 = arith.constant 1 : i32
    %36 = tpu.dynamic_rotate %17 by %c1_i32_8 dim 1 : vector<8x128xf32>, i32 -> vector<8x128xf32>
    %c127_i32 = arith.constant 127 : i32
    %37 = tpu.dynamic_rotate %17 by %c127_i32 dim 1 : vector<8x128xf32>, i32 -> vector<8x128xf32>
    %38 = arith.select %35, %36, %37 : vector<8x128xi1>, vector<8x128xf32>
    %39 = arith.subf %17, %38 : vector<8x128xf32>
    %40 = math.absf %39 : vector<8x128xf32>
    %cst_9 = arith.constant 0.000000e+00 : f32
    %41 = vector.broadcast %cst_9 : f32 to vector<8x128xf32>
    %42 = arith.subf %41, %40 : vector<8x128xf32>
    %43 = math.exp %42 : vector<8x128xf32>
    %cst_10 = arith.constant 0.000000e+00 : f32
    %44 = vector.broadcast %cst_10 : f32 to vector<8x128xf32>
    %45 = arith.subf %44, %39 : vector<8x128xf32>
    %cst_11 = arith.constant 0.000000e+00 : f32
    %46 = vector.broadcast %cst_11 : f32 to vector<8x128xf32>
    %47 = arith.maximumf %45, %46 : vector<8x128xf32>
    %cst_12 = arith.constant 1.000000e+00 : f32
    %48 = vector.broadcast %cst_12 : f32 to vector<8x128xf32>
    %49 = arith.addf %48, %43 : vector<8x128xf32>
    %50 = math.log %49 : vector<8x128xf32>
    %51 = arith.addf %47, %50 : vector<8x128xf32>
    %cst_13 = arith.constant 0.000000e+00 : f32
    %52 = vector.broadcast %cst_13 : f32 to vector<8x128xf32>
    %53 = arith.cmpf oge, %39, %52 : vector<8x128xf32>
    %cst_14 = arith.constant 1.000000e+00 : f32
    %54 = vector.broadcast %cst_14 : f32 to vector<8x128xf32>
    %55 = arith.select %53, %54, %43 : vector<8x128xi1>, vector<8x128xf32>
    %cst_15 = arith.constant 1.000000e+00 : f32
    %56 = vector.broadcast %cst_15 : f32 to vector<8x128xf32>
    %57 = arith.addf %56, %43 : vector<8x128xf32>
    %58 = arith.divf %55, %57 : vector<8x128xf32>
    %c0_16 = arith.constant 0 : index
    %c0_17 = arith.constant 0 : index
    %59 = vector.load %arg3[%c0_16, %c0_17] : memref<8x64xi32, #tpu.memory_space<vmem>>, vector<8x64xi32>
    %60 = arith.sitofp %59 : vector<8x64xi32> to vector<8x64xf32>
    %c0_18 = arith.constant 0 : index
    %c0_19 = arith.constant 0 : index
    %61 = vector.load %arg4[%c0_18, %c0_19] : memref<64x128xf32, #tpu.memory_space<vmem>>, vector<64x128xf32>
    %cst_20 = arith.constant dense<0.000000e+00> : vector<8x128xf32>
    %62 = tpu.matmul %60, %61, %cst_20 {dimension_numbers = #tpu.dot_dimension_numbers<[1], [0], [0], [1], [0, 0, 1, 1], [], []>} : vector<8x64xf32>, vector<64x128xf32>, vector<8x128xf32> -> vector<8x128xf32>
    %cst_21 = arith.constant 1.000000e+00 : f32
    %63 = vector.broadcast %cst_21 : f32 to vector<8x128xf32>
    %64 = arith.subf %63, %62 : vector<8x128xf32>
    %65 = arith.select %35, %62, %64 : vector<8x128xi1>, vector<8x128xf32>
    %c0_22 = arith.constant 0 : index
    %c0_23 = arith.constant 0 : index
    %66 = vector.load %arg5[%c0_22, %c0_23] : memref<1x128xf32, #tpu.memory_space<vmem>>, vector<1x128xf32>
    %67 = vector.broadcast %66 : vector<1x128xf32> to vector<8x128xf32>
    %68 = arith.mulf %67, %51 : vector<8x128xf32>
    %cst_24 = arith.constant 1.000000e+00 : f32
    %69 = vector.broadcast %cst_24 : f32 to vector<8x128xf32>
    %70 = arith.subf %69, %58 : vector<8x128xf32>
    %cst_25 = arith.constant 1.000000e+00 : f32
    %71 = vector.broadcast %cst_25 : f32 to vector<8x128xf32>
    %72 = arith.mulf %71, %70 : vector<8x128xf32>
    %73 = arith.addf %68, %72 : vector<8x128xf32>
    %74 = arith.mulf %65, %73 : vector<8x128xf32>
    %cst_26 = arith.constant 0.000000e+00 : f32
    %75 = vector.broadcast %cst_26 : f32 to vector<8x128xf32>
    %76 = arith.select %15, %74, %75 : vector<8x128xi1>, vector<8x128xf32>
    %c0_27 = arith.constant 0 : index
    %c0_28 = arith.constant 0 : index
    %77 = vector.load %arg6[%c0_27, %c0_28] : memref<1x128xf32, #tpu.memory_space<vmem>>, vector<1x128xf32>
    %cst_29 = arith.constant dense<0.000000e+00> : vector<128xf32>
    %78 = vector.multi_reduction <add>, %76, %cst_29 [0] : vector<8x128xf32> to vector<128xf32>
    %79 = vector.shape_cast %78 : vector<128xf32> to vector<1x128xf32>
    %80 = arith.addf %77, %79 : vector<1x128xf32>
    %c0_30 = arith.constant 0 : index
    %c0_31 = arith.constant 0 : index
    %81 = vector.load %arg6[%c0_30, %c0_31] : memref<1x128xf32, #tpu.memory_space<vmem>>, vector<1x128xf32>
    tpu.vector_store %arg6[%c0_30, %c0_31], %80 {strides = array<i32>} : memref<1x128xf32, #tpu.memory_space<vmem>>, vector<1x128xf32>,
    return
  }
  func.func @transform_0(%arg0: i32, %arg1: i32) -> (i32, i32) {
    %c1_i32 = arith.constant 1 : i32
    %0 = arith.muli %arg0, %c1_i32 : i32
    %1 = arith.addi %0, %arg1 : i32
    %c0_i32 = arith.constant 0 : i32
    %2 = arith.minsi %1, %c0_i32 : i32
    %c0_i32_0 = arith.constant 0 : i32
    %c0_i32_1 = arith.constant 0 : i32
    return %2, %c0_i32_0 : i32, i32
  }
  func.func @transform_1(%arg0: i32, %arg1: i32) -> (i32, i32) {
    %c1_i32 = arith.constant 1 : i32
    %0 = arith.muli %arg0, %c1_i32 : i32
    %1 = arith.addi %0, %arg1 : i32
    %c0_i32 = arith.constant 0 : i32
    %2 = arith.minsi %1, %c0_i32 : i32
    %c0_i32_0 = arith.constant 0 : i32
    %c0_i32_1 = arith.constant 0 : i32
    return %2, %c0_i32_0 : i32, i32
  }
  func.func @transform_2(%arg0: i32, %arg1: i32) -> (i32, i32) {
    %c0_i32 = arith.constant 0 : i32
    %c0_i32_0 = arith.constant 0 : i32
    %c0_i32_1 = arith.constant 0 : i32
    return %c0_i32, %c0_i32_0 : i32, i32
  }
  func.func @transform_3(%arg0: i32, %arg1: i32) -> (i32, i32) {
    %c0_i32 = arith.constant 0 : i32
    %c0_i32_0 = arith.constant 0 : i32
    %c0_i32_1 = arith.constant 0 : i32
    return %c0_i32, %c0_i32_0 : i32, i32
  }
  func.func @transform_4(%arg0: i32, %arg1: i32) -> (i32, i32) {
    %c0_i32 = arith.constant 0 : i32
    %c0_i32_0 = arith.constant 0 : i32
    return %c0_i32, %arg0 : i32, i32
  }
}

</mosaic_0001>

<llo_original>
// kernel: tpu_custom_call.1
$region0: #{tpu_custom_call.1}
  #allocation0 [shape = 'u32[]', space=smem, size = 0x4, offset = 0x4, fixed_abs, tag = 'smem constant byte address 0x4 - core index']
  #allocation1 [shape = 'u32[72,128]{1,0:T(1,128)}', space=vmem, size = 0x9000, scoped, tag = 'internal scratch']
  %s0 = inlined_call_operand.hbm [shape: f32[8,128], index: 0, kind: input, shape index: {}]
  %s1 = inlined_call_operand.hbm [shape: s32[8,64], index: 1, kind: input, shape index: {}]
  %s2 = inlined_call_operand.hbm [shape: f32[64,128], index: 2, kind: input, shape index: {}]
  %s3 = inlined_call_operand.vmem [shape: f32[1,128], index: 3, kind: input, shape index: {}]
  %s4 = inlined_call_operand.hbm [shape: f32[1,128], index: 4, kind: output, shape index: {}]
  %s5 = sld [smem:[#allocation0]]
  $region42: #{tpu_custom_call.1} parent=0
    _
  %s7 = ssub.s32 1, %s5
  %s8 = scalar_select 0, %s7, %s5
  $region1: #{tpu_custom_call.1} parent=0
    #allocation2 [shape = 'u8[4096]{0}', space=vmem, size = 0x1000, scoped, tag = 'input window, operand 0, single buffered']
    #allocation3 [shape = 's32[1]{0}', space=sflag, size = 0x4, scoped, tag = 'scoped memory for tpu_custom_call.1']
    #allocation4 [shape = 's32[1]{0}', space=sflag, size = 0x4, scoped, tag = 'scoped memory for tpu_custom_call.1']
    #allocation5 [shape = 'u8[4096]{0}', space=vmem, size = 0x1000, scoped, tag = 'input window, operand 1, single buffered']
    #allocation6 [shape = 's32[1]{0}', space=sflag, size = 0x4, scoped, tag = 'scoped memory for tpu_custom_call.1']
    #allocation7 [shape = 'u8[32768]{0}', space=vmem, size = 0x8000, scoped, tag = 'input window, operand 2, single buffered']
    #allocation8 [shape = 'u8[512]{0}', space=vmem, size = 0x400, scoped, tag = 'output window, operand 0, single buffered']
    %9 = vsyncpa [#allocation3], 0
    %10 = vsyncpa [#allocation6], 0
    %11 = vsyncpa [#allocation4], 0
    // Predicated region
    $region2: #{tpu_custom_call.1} parent=1 // pred_check
      _
    $region3: #{tpu_custom_call.1} parent=1 // pred_check_branch
      %13 = sbr.rel (0) target = $region5
    $region4: #{tpu_custom_call.1} parent=1 // pred_region
      %s14 = sadd.s32 0, 0
      %p15 = scmp.lt.s32.totalorder %s14, 0
      %s16 = scalar_select %p15, %s14, 0
      %18 = vsyncadd [#allocation3], 0
      %s19 = smul.addr %s16, 8
      %s20 = scalar_lea.hbm %s0, %s19
      %s22 = sshll.u32 %s20, 4
      %s23 = int_to_ptr.hbm [resolvable:$true] %s22
      %s24 = sshll.u32 [#allocation2], 4
      %s25 = int_to_ptr.vmem [resolvable:$true] %s24
      %27 = dma.hbm_to_vmem [thread:$0]  %s23, 128, %s25, [#allocation3]
    $region5: #{tpu_custom_call.1} parent=1 // pred_fallthru
      _
    // Predicated region
    $region6: #{tpu_custom_call.1} parent=1 // pred_check
      _
    $region7: #{tpu_custom_call.1} parent=1 // pred_check_branch
      %29 = sbr.rel (0) target = $region9
    $region8: #{tpu_custom_call.1} parent=1 // pred_region
      %s30 = sadd.s32 0, 0
      %p31 = scmp.lt.s32.totalorder %s30, 0
      %s32 = scalar_select %p31, %s30, 0
      %34 = vsyncadd [#allocation6], 0
      %s35 = smul.addr %s32, 8
      %s36 = scalar_lea.hbm %s1, %s35
      %s38 = sshll.u32 %s36, 4
      %s39 = int_to_ptr.hbm [resolvable:$true] %s38
      %s40 = sshll.u32 [#allocation5], 4
      %s41 = int_to_ptr.vmem [resolvable:$true] %s40
      %43 = dma.hbm_to_vmem [thread:$0]  %s39, 128, %s41, [#allocation6]
    $region9: #{tpu_custom_call.1} parent=1 // pred_fallthru
      _
    // Predicated region
    $region10: #{tpu_custom_call.1} parent=1 // pred_check
      _
    $region11: #{tpu_custom_call.1} parent=1 // pred_check_branch
      %45 = sbr.rel (0) target = $region13
    $region12: #{tpu_custom_call.1} parent=1 // pred_region
      %47 = vsyncadd [#allocation6], 0
      %s48 = sshll.u32 %s2, 4
      %s49 = int_to_ptr.hbm [resolvable:$true] %s48
      %s50 = sshll.u32 [#allocation7], 4
      %s51 = int_to_ptr.vmem [resolvable:$true] %s50
      %56 = dma.hbm_to_vmem [thread:$0]  %s49, 1024, %s51, [#allocation6], 128, 128, 8
    $region13: #{tpu_custom_call.1} parent=1 // pred_fallthru
      _
    // Predicated region
    $region14: #{tpu_custom_call.1} parent=1 // pred_check
      _
    $region15: #{tpu_custom_call.1} parent=1 // pred_check_branch
      %58 = sbr.rel (0) target = $region17
    $region16: #{tpu_custom_call.1} parent=1 // pred_region
      _
    $region17: #{tpu_custom_call.1} parent=1 // pred_fallthru
      _
    // Predicated region
    $region18: #{tpu_custom_call.1} parent=1 // pred_check
      _
    $region19: #{tpu_custom_call.1} parent=1 // pred_check_branch
      %60 = sbr.rel (0) target = $region21
    $region20: #{tpu_custom_call.1} parent=1 // pred_region
      %62 = dma.done [#allocation3], 128
    $region21: #{tpu_custom_call.1} parent=1 // pred_fallthru
      _
    // Predicated region
    $region22: #{tpu_custom_call.1} parent=1 // pred_check
      _
    $region23: #{tpu_custom_call.1} parent=1 // pred_check_branch
      %64 = sbr.rel (0) target = $region25
    $region24: #{tpu_custom_call.1} parent=1 // pred_region
      %66 = dma.done [#allocation6], 128
    $region25: #{tpu_custom_call.1} parent=1 // pred_fallthru
      _
    // Predicated region
    $region26: #{tpu_custom_call.1} parent=1 // pred_check
      _
    $region27: #{tpu_custom_call.1} parent=1 // pred_check_branch
      %68 = sbr.rel (0) target = $region29
    $region28: #{tpu_custom_call.1} parent=1 // pred_region
      %70 = dma.done [#allocation6], 1024
    $region29: #{tpu_custom_call.1} parent=1 // pred_fallthru
      _
    %s71 = sadd.s32 0, 0
    %p72 = scmp.lt.s32.totalorder %s71, 0
    %s73 = scalar_select %p72, %s71, 0
    %s74 = sadd.s32 0, 0
    %p75 = scmp.lt.s32.totalorder %s74, 0
    %s76 = scalar_select %p75, %s74, 0
    %s77 = sadd.s32 0, 0
    %p78 = scmp.eq.s32.totalorder 0, 0
    // Predicated region
    $region30: #{tpu_custom_call.1} parent=1 // pred_check
      %p79 = pneg %p78
    $region31: #{tpu_custom_call.1} parent=1 // pred_check_branch
      %81 = sbr.rel (%p79) target = $region33
    $region32: #{tpu_custom_call.1} parent=1 // pred_region
      %82 = vst [vmem:[#allocation8] sm:$0x1] 0.0
    $region33: #{tpu_custom_call.1} parent=1 // pred_fallthru
      _
    %v83 = vld [vmem:[#allocation2] sm:$0xff]
    %v84 = vlaneseq
    %v85 = vshrl.u32 %v84, 7
    %v86 = vlaneseq
    %v87 = vand.u32 %v86, 127
    %s88 = smul.u32 %s77, 8
    %v89 = vstv %s88
    %v90 = vadd.s32 %v89, %v85
    %v91 = vmul.u32 %v90, 128
    %v92 = vadd.s32 %v91, %v87
    %vm93 = vcmp.lt.s32.totalorder %v92, 32
    %v94 = vsel %vm93, %v83, 0.0
    %vm95 = vcmp.lt.s32.totalorder %v87, 0
    %v96 = vsub.s32 0, %v87
    %v97 = vsel %vm95, %v96, %v87
    %v98 = vshrl.u32 %v97, 1
    %v99 = vand.u32 %v97, 1
    %v100 = vsub.s32 0, %v99
    %v101 = vsel %vm95, %v100, %v99
    %vm102 = vcmp.ne.s32.totalorder %v101, 0
    %vm103 = vcmp.lt.s32.totalorder %v101, 0
    %vm104 = vmand %vm103, %vm102
    %v105 = vadd.s32 %v101, 2
    %v106 = vsel %vm104, %v105, %v101
    %vm107 = vcmp.eq.s32.totalorder %v106, 1
    %108 = vrot.lane.b32.xlu0 %v94, 1
    %v109 = vpop.permute.xlu0 %108
    %110 = vrot.lane.b32.xlu0 %v94, 127
    %v111 = vpop.permute.xlu0 %110
    %v112 = vsel %vm107, %v109, %v111
    %v113 = vsub.f32 %v94, %v112
    %v114 = vand.u32 2147483647, %v113
    %v115 = vsub.f32 0.0, %v114
    %v116 = vmul.f32 %v115, 1.442695
    %v117 = vpow.pop %v116
    %v118 = vsub.f32 0.0, %v113
    %v119 = vmax.f32 %v118, 0.0
    %v120 = vadd.f32 %v117, 1.0
    %v121 = vlog2.pop %v120
    %v122 = vmul.f32 %v121, 0.6931472
    %v123 = vadd.f32 %v119, %v122
    %vm124 = vcmp.ge.f32.partialorder %v113, 0.0
    %v125 = vsel %vm124, 1.0, %v117
    %v126 = vrcp.pop %v120
    %v127 = vmul.f32 %v120, %v126
    %v128 = vsub.f32 1.0, %v127
    %v129 = vmul.f32 %v126, %v128
    %v130 = vadd.f32 %v126, %v129
    %vm131 = vweird.f32 %v120
    %vm132 = vweird.f32 %v126
    %vm133 = vmor %vm131, %vm132
    %v134 = vsel %vm133, %v126, %v130
    %v135 = vand.u32 2147483647, %v120
    %vm136 = vcmp.eq.f32.partialorder %v135, 8.507059e+37
    %v137 = vand.u32 %v120, 2147483648
    %v138 = vor.u32 1.1754944e-38, %v137
    %v139 = vsel %vm136, %v138, %v134
    %v140 = vmul.f32 %v125, %v139
    %v141 = vld [vmem:[#allocation5] sm:$0xff]
    %v142 = vcvt.s32.f32 %v141
    %v143 = vld [vmem:[#allocation7] sm:$0xff]
    %v144 = vld [vmem:[#allocation7 + $0x8] sm:$0xff]
    %v145 = vld [vmem:[#allocation7 + $0x10] sm:$0xff]
    %v146 = vld [vmem:[#allocation7 + $0x18] sm:$0xff]
    %v147 = vld [vmem:[#allocation7 + $0x20] sm:$0xff]
    %v148 = vld [vmem:[#allocation7 + $0x28] sm:$0xff]
    %v149 = vld [vmem:[#allocation7 + $0x30] sm:$0xff]
    %v150 = vld [vmem:[#allocation7 + $0x38] sm:$0xff]
    %vm151 = vcmask 523264
    %v153 = vsel %vm151, %v142, 0
    %155 = vmatpush.msra.mxu0 0.0
    %156 = vmatpush.msra.mxu0 0.0
    %157 = vmatpush.msra.mxu0 0.0
    %158 = vmatpush.msra.mxu0 0.0
    %159 = vmatpush.msra.mxu0 0.0
    %160 = vmatpush.msra.mxu0 0.0
    %161 = vmatpush.msra.mxu0 0.0
    %162 = vmatpush.msra.mxu0 0.0
    %163 = vmatpush.msra.mxu0 %v150
    %164 = vmatpush.msra.mxu0 %v149
    %165 = vmatpush.msra.mxu0 %v148
    %166 = vmatpush.msra.mxu0 %v147
    %167 = vmatpush.msra.mxu0 %v146
    %168 = vmatpush.msra.mxu0 %v145
    %169 = vmatpush.msra.mxu0 %v144
    %170 = vmatpush.msra.mxu0 %v143
    %171 = vmatmul.f32.gmra.mxu0 %v153
    %v172 = vpop.f32.mrf.mxu0
    %v173 = vadd.f32 0.0, %v172
    %174 = vdwg.mxu0
    %v175 = vsub.f32 1.0, %v173
    %v176 = vsel %vm107, %v173, %v175
    %v177 = vld [vmem:[%s3] sm:$0x1]
    %v179 = vperm.slane %v177, 0
    %v181 = vmul.f32 %v179, %v123
    %v182 = vsub.f32 1.0, %v140
    %v183 = vadd.f32 %v181, %v182
    %v184 = vmul.f32 %v176, %v183
    %v185 = vsel %vm93, %v184, 0.0
    %v186 = vld [vmem:[#allocation8] sm:$0x1]
    %v187 = vrot.slane %v185, 4
    %v188 = vadd.f32 %v185, %v187
    %v189 = vrot.slane %v188, 2
    %v190 = vadd.f32 %v188, %v189
    %v191 = vrot.slane %v190, 1
    %v192 = vadd.f32 %v190, %v191
    %v193 = vadd.f32 %v186, %v192
    %194 = vst [vmem:[#allocation8] sm:$0x1] %v193
    // Predicated region
    $region34: #{tpu_custom_call.1} parent=1 // pred_check
      _
    $region35: #{tpu_custom_call.1} parent=1 // pred_check_branch
      %196 = sbr.rel (0) target = $region37
    $region36: #{tpu_custom_call.1} parent=1 // pred_region
      %198 = vsyncadd [#allocation4], 0
      %s200 = sshll.u32 [#allocation8], 4
      %s201 = int_to_ptr.vmem [resolvable:$true] %s200
      %s202 = sshll.u32 %s4, 4
      %s203 = int_to_ptr.hbm [resolvable:$true] %s202
      %205 = dma.vmem_to_hbm [thread:$0]  %s201, 16, %s203, [#allocation4]
    $region37: #{tpu_custom_call.1} parent=1 // pred_fallthru
      _
    // Predicated region
    $region38: #{tpu_custom_call.1} parent=1 // pred_check
      _
    $region39: #{tpu_custom_call.1} parent=1 // pred_check_branch
      %207 = sbr.rel (0) target = $region41
    $region40: #{tpu_custom_call.1} parent=1 // pred_region
      %209 = dma.done [#allocation4], 16
    $region41: #{tpu_custom_call.1} parent=1 // pred_fallthru
      _
    %210 = vsyncpa [#allocation3], 1
    %211 = vsyncpa [#allocation6], 1
    %212 = vsyncpa [#allocation4], 1

</llo_original>
